<compile_context>
chip_gen: v5e
topology: v5e:2x2
jax: 0.10.0
libtpu: 0.0.40
codegen_flags: <defaults>
</compile_context>

<pallas_src>
from functools import partial

import jax
import jax.numpy as jnp
from jax import lax
from jax.experimental import pallas as pl
from jax.experimental.pallas import tpu as pltpu

EPS = 1e-08

# Keep the whole (1, N, K) slab resident only if double-buffered in/out blocks
# plus f32 temporaries stay well under v7x's 64 MiB physical VMEM.
_RESIDENT_VMEM_BUDGET = 24 * 1024 * 1024


# --------------------------------------------------------------------------
# Resident single-pass kernel (whole (1, N, K) slab per batch element).
# --------------------------------------------------------------------------
def _gln_resident_kernel(y_ref, gamma_ref, beta_ref, o_ref, *, inv_count):
    y = y_ref[...].astype(jnp.float32)                    # (1, N, K)

    # One-pass sum / sum-of-squares in f32, staged reductions:
    # lane (K) reduce first, then sublane (N) reduce.
    s = jnp.sum(y, axis=2, keepdims=True)                 # (1, N, 1)
    sq = jnp.sum(y * y, axis=2, keepdims=True)            # (1, N, 1)
    total = jnp.sum(s, axis=1, keepdims=True)             # (1, 1, 1)
    total_sq = jnp.sum(sq, axis=1, keepdims=True)         # (1, 1, 1)

    mean = total * inv_count
    var = jnp.maximum(total_sq * inv_count - mean * mean, 0.0)
    inv_std = lax.rsqrt(var + EPS)

    gamma = gamma_ref[...].astype(jnp.float32)            # (1, N, 1)
    beta = beta_ref[...].astype(jnp.float32)
    scale = gamma * inv_std                               # (1, N, 1)
    shift = beta - mean * scale                           # (1, N, 1)

    # Fused affine: 2 VALU ops per element, no `centered` temporary.
    o_ref[...] = (y * scale + shift).astype(o_ref.dtype)


def _gln_resident(y, gamma, beta):
    M, N, K = y.shape
    itemsize = jnp.dtype(y.dtype).itemsize
    live_bytes = 4 * N * K * itemsize + 2 * N * K * 4
    vmem_limit = int(min(64 << 20, max(32 << 20, live_bytes + (2 << 20))))
    return pl.pallas_call(
        partial(_gln_resident_kernel, inv_count=1.0 / float(N * K)),
        out_shape=jax.ShapeDtypeStruct((M, N, K), y.dtype),
        grid_spec=pltpu.PrefetchScalarGridSpec(
            num_scalar_prefetch=0,
            grid=(M,),
            in_specs=[
                pl.BlockSpec((1, N, K), lambda m: (m, 0, 0)),
                pl.BlockSpec((1, N, 1), lambda m: (0, 0, 0)),
                pl.BlockSpec((1, N, 1), lambda m: (0, 0, 0)),
            ],
            out_specs=pl.BlockSpec((1, N, K), lambda m: (m, 0, 0)),
        ),
        compiler_params=pltpu.CompilerParams(
            dimension_semantics=("parallel",),
            vmem_limit_bytes=vmem_limit,
        ),
    )(y, gamma, beta)


# --------------------------------------------------------------------------
# Tiled two-pass path (large N*K).
# --------------------------------------------------------------------------
def _gln_stats_kernel(y_ref, gamma_ref, beta_ref, scale_ref, shift_ref,
                      sum_acc, sq_acc, *, inv_count):
    k = pl.program_id(1)

    @pl.when(k == 0)
    def _():
        sum_acc[...] = jnp.zeros_like(sum_acc)
        sq_acc[...] = jnp.zeros_like(sq_acc)

    y = y_ref[...].astype(jnp.float32)                    # (1, N, TK)
    sum_acc[...] += jnp.sum(y, axis=2, keepdims=True)     # (1, N, 1)
    sq_acc[...] += jnp.sum(y * y, axis=2, keepdims=True)  # (1, N, 1)

    @pl.when(k == pl.num_programs(1) - 1)
    def _():
        total = jnp.sum(sum_acc[...], axis=1, keepdims=True)     # (1, 1, 1)
        total_sq = jnp.sum(sq_acc[...], axis=1, keepdims=True)   # (1, 1, 1)
        mean = total * inv_count
        var = jnp.maximum(total_sq * inv_count - mean * mean, 0.0)
        inv_std = lax.rsqrt(var + EPS)
        gamma = gamma_ref[...].astype(jnp.float32)               # (1, N, 1)
        beta = beta_ref[...].astype(jnp.float32)
        scale = gamma * inv_std                                  # (1, N, 1)
        shift = beta - mean * scale
        scale_ref[...] = scale
        shift_ref[...] = shift


def _gln_norm_kernel(y_ref, scale_ref, shift_ref, o_ref):
    y = y_ref[...].astype(jnp.float32)                    # (1, N, TK)
    scale = scale_ref[...]                                # (1, N, 1) f32
    shift = shift_ref[...]                                # (1, N, 1) f32
    o_ref[...] = (y * scale + shift).astype(o_ref.dtype)


def _choose_block_k(K, N, itemsize, budget_bytes=20 << 20):
    """Largest K-tile that divides K, is a multiple of 128, and keeps the
    double-buffered in+out blocks under `budget_bytes`."""
    if K % 128 != 0:
        # TODO(synk): mask partial K tiles (true-count divisor) when K is large
        # and not a multiple of 128; for now take the whole axis.
        return K
    for tk in (8192, 4096, 2048, 1024, 512, 256, 128):
        if K % tk == 0 and 4 * N * tk * itemsize <= budget_bytes:
            return tk
    return 128


def _gln_tiled(y, gamma, beta, *, block_k=None):
    M, N, K = y.shape
    itemsize = jnp.dtype(y.dtype).itemsize
    if block_k is None:
        block_k = _choose_block_k(K, N, itemsize)
    assert K % block_k == 0, (K, block_k)
    tk = block_k
    kt = K // tk

    block_bytes = N * tk * itemsize
    vmem_limit = int(min(
        64 << 20,
        max(32 << 20, 4 * block_bytes + 2 * N * tk * 4 + (2 << 20))))

    # Pass 1: per-batch fused affine (scale, shift), each [M, N, 1] f32.
    scale, shift = pl.pallas_call(
        partial(_gln_stats_kernel, inv_count=1.0 / float(N * K)),
        out_shape=(
            jax.ShapeDtypeStruct((M, N, 1), jnp.float32),
            jax.ShapeDtypeStruct((M, N, 1), jnp.float32),
        ),
        grid_spec=pltpu.PrefetchScalarGridSpec(
            num_scalar_prefetch=0,
            grid=(M, kt),
            in_specs=[
                pl.BlockSpec((1, N, tk), lambda m, k: (m, 0, k)),
                pl.BlockSpec((1, N, 1), lambda m, k: (0, 0, 0)),
                pl.BlockSpec((1, N, 1), lambda m, k: (0, 0, 0)),
            ],
            out_specs=[
                pl.BlockSpec((1, N, 1), lambda m, k: (m, 0, 0)),
                pl.BlockSpec((1, N, 1), lambda m, k: (m, 0, 0)),
            ],
            scratch_shapes=[
                pltpu.VMEM((1, N, 1), jnp.float32),
                pltpu.VMEM((1, N, 1), jnp.float32),
            ],
        ),
        compiler_params=pltpu.CompilerParams(
            dimension_semantics=("parallel", "arbitrary"),
            vmem_limit_bytes=vmem_limit,
        ),
    )(y, gamma, beta)

    # Pass 2: out = y * scale + shift (per-channel broadcast over K).
    return pl.pallas_call(
        _gln_norm_kernel,
        out_shape=jax.ShapeDtypeStruct((M, N, K), y.dtype),
        grid_spec=pltpu.PrefetchScalarGridSpec(
            num_scalar_prefetch=0,
            grid=(M, kt),
            in_specs=[
                pl.BlockSpec((1, N, tk), lambda m, k: (m, 0, k)),
                pl.BlockSpec((1, N, 1), lambda m, k: (m, 0, 0)),
                pl.BlockSpec((1, N, 1), lambda m, k: (m, 0, 0)),
            ],
            out_specs=pl.BlockSpec((1, N, tk), lambda m, k: (m, 0, k)),
        ),
        compiler_params=pltpu.CompilerParams(
            dimension_semantics=("parallel", "parallel"),
            vmem_limit_bytes=vmem_limit,
        ),
    )(y, scale, shift)


# --------------------------------------------------------------------------
# Public wrapper.
# --------------------------------------------------------------------------
def global_layer_norm(y, gamma, beta, *, block_k=None, force_tiled=False):
    """y: [M, N, K], gamma/beta: [1, N, 1] -> [M, N, K]."""
    M, N, K = y.shape
    gamma = gamma.reshape(1, N, 1)
    beta = beta.reshape(1, N, 1)
    itemsize = jnp.dtype(y.dtype).itemsize

    # Estimated live VMEM if the whole per-batch slab stays resident:
    # double-buffered input + output (native dtype) + f32 temporaries.
    resident_live = 4 * N * K * itemsize + 2 * N * K * 4
    if (not force_tiled) and block_k is None and resident_live <= _RESIDENT_VMEM_BUDGET:
        return _gln_resident(y, gamma, beta)
    return _gln_tiled(y, gamma, beta, block_k=block_k)


def reference_gln(y, gamma, beta):
    y32 = y.astype(jnp.float32)
    mean = y32.mean(axis=1, keepdims=True).mean(axis=2, keepdims=True)
    var = ((y32 - mean) ** 2).mean(axis=1, keepdims=True).mean(axis=2, keepdims=True)
    out = gamma * (y32 - mean) / jnp.sqrt(var + EPS) + beta
    return out.astype(y.dtype)


if __name__ == "__main__":
    key = jax.random.PRNGKey(0)
    k1, k2 = jax.random.split(key)

    # --- Test 1: small shape -> resident single-pass path ---
    M, N, K = 2, 4, 16  # batch, channels, length
    y1 = jax.random.normal(k1, (M, N, K), dtype=jnp.float32)
    # Deterministic parameter init mirroring reset_parameters(): gamma=1, beta=0.
    gamma1 = jnp.ones((1, N, 1), dtype=jnp.float32)
    beta1 = jnp.zeros((1, N, 1), dtype=jnp.float32)

    out1 = jax.block_until_ready(global_layer_norm(y1, gamma1, beta1))
    ref1 = reference_gln(y1, gamma1, beta1)
    assert out1.shape == (M, N, K)
    assert jnp.allclose(out1, ref1, atol=1e-4, rtol=1e-4), "mismatch (resident path)"

    # --- Test 2: force the tiled two-pass path (grid over K tiles) ---
    M2, N2, K2 = 2, 8, 512
    y2 = jax.random.normal(k2, (M2, N2, K2), dtype=jnp.float32)
    gamma2 = jnp.full((1, N2, 1), 0.5, dtype=jnp.float32)   # non-trivial affine
    beta2 = jnp.full((1, N2, 1), 0.25, dtype=jnp.float32)

    out2 = jax.block_until_ready(
        global_layer_norm(y2, gamma2, beta2, block_k=128, force_tiled=True))
    ref2 = reference_gln(y2, gamma2, beta2)
    assert out2.shape == (M2, N2, K2)
    assert jnp.allclose(out2, ref2, atol=1e-4, rtol=1e-4), "mismatch (tiled path)"

    print("KERNEL_OK")
</pallas_src>

<mosaic_0001>
module attributes {stable_mosaic.version = 11 : i64} {
  func.func @_gln_resident_kernel(%arg0: i32, %arg1: memref<1x4x16xf32, #tpu.memory_space<vmem>>, %arg2: memref<1x4x1xf32, #tpu.memory_space<vmem>>, %arg3: memref<1x4x1xf32, #tpu.memory_space<vmem>>, %arg4: memref<1x4x16xf32, #tpu.memory_space<vmem>>) attributes {dimension_semantics = [#tpu.dimension_semantics<parallel>], iteration_bounds = array<i64: 2>, scalar_prefetch = 0 : i64, scratch_operands = 0 : i64, tpu.core_type = #tpu.core_type<tc>, window_params = [{transform_indices = @transform_0, window_bounds = array<i64: 1, 4, 16>}, {pipeline_mode = #tpu.pipeline_mode<synchronous>, transform_indices = @transform_1, window_bounds = array<i64: 1, 4, 1>}, {pipeline_mode = #tpu.pipeline_mode<synchronous>, transform_indices = @transform_2, window_bounds = array<i64: 1, 4, 1>}, {transform_indices = @transform_3, window_bounds = array<i64: 1, 4, 16>}]} {
    %c0 = arith.constant 0 : index
    %c0_0 = arith.constant 0 : index
    %c0_1 = arith.constant 0 : index
    %0 = vector.load %arg1[%c0, %c0_0, %c0_1] : memref<1x4x16xf32, #tpu.memory_space<vmem>>, vector<1x4x16xf32>
    %cst = arith.constant dense<0.000000e+00> : vector<1x4xf32>
    %1 = vector.multi_reduction <add>, %0, %cst [2] : vector<1x4x16xf32> to vector<1x4xf32>
    %2 = vector.shape_cast %1 : vector<1x4xf32> to vector<1x4x1xf32>
    %3 = arith.mulf %0, %0 : vector<1x4x16xf32>
    %cst_2 = arith.constant dense<0.000000e+00> : vector<1x4xf32>
    %4 = vector.multi_reduction <add>, %3, %cst_2 [2] : vector<1x4x16xf32> to vector<1x4xf32>
    %5 = vector.shape_cast %4 : vector<1x4xf32> to vector<1x4x1xf32>
    %cst_3 = arith.constant dense<0.000000e+00> : vector<1x1xf32>
    %6 = vector.multi_reduction <add>, %2, %cst_3 [1] : vector<1x4x1xf32> to vector<1x1xf32>
    %7 = vector.shape_cast %6 : vector<1x1xf32> to vector<1x1x1xf32>
    %cst_4 = arith.constant dense<0.000000e+00> : vector<1x1xf32>
    %8 = vector.multi_reduction <add>, %5, %cst_4 [1] : vector<1x4x1xf32> to vector<1x1xf32>
    %9 = vector.shape_cast %8 : vector<1x1xf32> to vector<1x1x1xf32>
    %cst_5 = arith.constant 1.562500e-02 : f32
    %10 = vector.broadcast %cst_5 : f32 to vector<1x1x1xf32>
    %11 = arith.mulf %7, %10 : vector<1x1x1xf32>
    %cst_6 = arith.constant 1.562500e-02 : f32
    %12 = vector.broadcast %cst_6 : f32 to vector<1x1x1xf32>
    %13 = arith.mulf %9, %12 : vector<1x1x1xf32>
    %14 = arith.mulf %11, %11 : vector<1x1x1xf32>
    %15 = arith.subf %13, %14 : vector<1x1x1xf32>
    %cst_7 = arith.constant 0.000000e+00 : f32
    %16 = vector.broadcast %cst_7 : f32 to vector<1x1x1xf32>
    %17 = arith.maximumf %15, %16 : vector<1x1x1xf32>
    %cst_8 = arith.constant 9.99999993E-9 : f32
    %18 = vector.broadcast %cst_8 : f32 to vector<1x1x1xf32>
    %19 = arith.addf %17, %18 : vector<1x1x1xf32>
    %20 = math.rsqrt %19 : vector<1x1x1xf32>
    %c0_9 = arith.constant 0 : index
    %c0_10 = arith.constant 0 : index
    %c0_11 = arith.constant 0 : index
    %21 = vector.load %arg2[%c0_9, %c0_10, %c0_11] : memref<1x4x1xf32, #tpu.memory_space<vmem>>, vector<1x4x1xf32>
    %c0_12 = arith.constant 0 : index
    %c0_13 = arith.constant 0 : index
    %c0_14 = arith.constant 0 : index
    %22 = vector.load %arg3[%c0_12, %c0_13, %c0_14] : memref<1x4x1xf32, #tpu.memory_space<vmem>>, vector<1x4x1xf32>
    %23 = vector.broadcast %20 : vector<1x1x1xf32> to vector<1x4x1xf32>
    %24 = arith.mulf %21, %23 : vector<1x4x1xf32>
    %25 = vector.broadcast %11 : vector<1x1x1xf32> to vector<1x4x1xf32>
    %26 = arith.mulf %25, %24 : vector<1x4x1xf32>
    %27 = arith.subf %22, %26 : vector<1x4x1xf32>
    %28 = vector.broadcast %24 : vector<1x4x1xf32> to vector<1x4x16xf32>
    %29 = arith.mulf %0, %28 : vector<1x4x16xf32>
    %30 = vector.broadcast %27 : vector<1x4x1xf32> to vector<1x4x16xf32>
    %31 = arith.addf %29, %30 : vector<1x4x16xf32>
    %c0_15 = arith.constant 0 : index
    %c0_16 = arith.constant 0 : index
    %c0_17 = arith.constant 0 : index
    %32 = vector.load %arg4[%c0_15, %c0_16, %c0_17] : memref<1x4x16xf32, #tpu.memory_space<vmem>>, vector<1x4x16xf32>
    tpu.vector_store %arg4[%c0_15, %c0_16, %c0_17], %31 {strides = array<i32>} : memref<1x4x16xf32, #tpu.memory_space<vmem>>, vector<1x4x16xf32>,
    return
  }
  func.func @transform_0(%arg0: i32) -> (i32, i32, i32) {
    %c0_i32 = arith.constant 0 : i32
    %c0_i32_0 = arith.constant 0 : i32
    %c0_i32_1 = arith.constant 0 : i32
    return %arg0, %c0_i32, %c0_i32_0 : i32, i32, i32
  }
  func.func @transform_1(%arg0: i32) -> (i32, i32, i32) {
    %c0_i32 = arith.constant 0 : i32
    %c0_i32_0 = arith.constant 0 : i32
    %c0_i32_1 = arith.constant 0 : i32
    %c0_i32_2 = arith.constant 0 : i32
    return %c0_i32, %c0_i32_0, %c0_i32_1 : i32, i32, i32
  }
  func.func @transform_2(%arg0: i32) -> (i32, i32, i32) {
    %c0_i32 = arith.constant 0 : i32
    %c0_i32_0 = arith.constant 0 : i32
    %c0_i32_1 = arith.constant 0 : i32
    %c0_i32_2 = arith.constant 0 : i32
    return %c0_i32, %c0_i32_0, %c0_i32_1 : i32, i32, i32
  }
  func.func @transform_3(%arg0: i32) -> (i32, i32, i32) {
    %c0_i32 = arith.constant 0 : i32
    %c0_i32_0 = arith.constant 0 : i32
    %c0_i32_1 = arith.constant 0 : i32
    return %arg0, %c0_i32, %c0_i32_0 : i32, i32, i32
  }
}

</mosaic_0001>

<llo_original>
// kernel: tpu_custom_call.1
$region0: #{tpu_custom_call.1}
  #allocation0 [shape = 'u32[]', space=smem, size = 0x4, offset = 0x4, fixed_abs, tag = 'smem constant byte address 0x4 - core index']
  #allocation1 [shape = 'u32[72,128]{1,0:T(1,128)}', space=vmem, size = 0x9000, scoped, tag = 'internal scratch']
  %s0 = inlined_call_operand.vmem [shape: f32[2,4,16], index: 0, kind: input, shape index: {}]
  %s1 = inlined_call_operand.vmem [shape: f32[1,4,1], index: 1, kind: input, shape index: {}]
  %s2 = inlined_call_operand.vmem [shape: f32[1,4,1], index: 2, kind: input, shape index: {}]
  %s3 = inlined_call_operand.hbm [shape: f32[2,4,16], index: 3, kind: output, shape index: {}]
  %s4 = sld [smem:[#allocation0]]
  $region45: #{tpu_custom_call.1} parent=0
    _
  %s6 = ssub.s32 1, %s4
  %s7 = scalar_select 0, %s6, %s4
  $region1: #{tpu_custom_call.1} parent=0
    #allocation2 [shape = 'u8[4096]{0}', space=vmem, size = 0x1000, scoped, tag = 'output window, operand 0']
    #allocation3 [shape = 's32[2]{0}', space=sflag, size = 0x8, scoped, tag = 'scoped memory for tpu_custom_call.1']
    %8 = vsyncpa [#allocation3], 0
    %s9 = scalar_lea.sflag [#allocation3], 1
    %10 = vsyncpa %s9, 0
    loop: start=0, step=1, limit=4
    $region2: #{tpu_custom_call.1} parent=1 // loop_pre_header
      _
    $region3: #{tpu_custom_call.1} parent=1 // loop_header
      %s12 = sphi 0, %s16
      %p13 = scmp.ge.s32.totalorder %s12, 4
      %s22 = sphi 0, %s24
      %s25 = sphi 0, %s22
      %s26 = sphi 0, %s25
      %s42 = sphi 0, %s26
      %s46 = sphi 0, %s46
      %s48 = sphi 0, %s46
      %s49 = sphi 0, %s48
      %s63 = sphi 0, %s49
      %s67 = sphi 0, %s67
      %s69 = sphi 0, %s67
      %s70 = sphi 0, %s69
      %s84 = sphi 0, %s70
      %s90 = sphi 0, %s92
      %s93 = sphi 0, %s90
      %s94 = sphi 0, %s93
      %s110 = sphi 0, %s94
    $region4: #{tpu_custom_call.1} parent=1 // loop_header_branch
      %15 = sbr.rel (%p13) target = $region8
    $region5: #{tpu_custom_call.1} parent=1 // loop_body
      %s17 = ssub.s32 %s12, 1
      %s18 = ssub.s32 %s12, 2
      %s19 = sadd.s32 %s12, 1
      %s20 = ssub.s32 %s12, %s19
      %p21 = scmp.eq.s32.totalorder %s20, 0
      %s23 = sadd.s32 %s22, 1
      %s24 = scalar_select %p21, %s22, %s23
      %p27 = pneg %p21
      %p28 = scmp.eq.s32.totalorder %s12, 1
      %p29 = por %p27, %p28
      %p30 = scmp.ne.s32.totalorder %s22, %s25
      %p31 = scmp.eq.s32.totalorder %s12, 0
      %p32 = por %p30, %p31
      %p33 = scmp.ne.s32.totalorder %s22, %s25
      %p34 = scmp.eq.s32.totalorder %s17, 1
      %p35 = por %p33, %p34
      %p36 = scmp.ne.s32.totalorder %s25, %s26
      %p37 = scmp.eq.s32.totalorder %s17, 0
      %p38 = por %p36, %p37
      %p39 = scmp.ne.s32.totalorder %s25, %s26
      %p40 = scmp.eq.s32.totalorder %s18, 1
      %p41 = por %p39, %p40
      %p43 = scmp.ne.s32.totalorder %s26, %s42
      %p44 = scmp.eq.s32.totalorder %s18, 0
      %p45 = por %p43, %p44
      %s47 = sadd.s32 %s46, 1
      %p50 = scmp.eq.s32.totalorder %s12, 1
      %p51 = scmp.ne.s32.totalorder %s46, %s48
      %p52 = scmp.eq.s32.totalorder %s12, 0
      %p53 = por %p51, %p52
      %p54 = scmp.ne.s32.totalorder %s46, %s48
      %p55 = scmp.eq.s32.totalorder %s17, 1
      %p56 = por %p54, %p55
      %p57 = scmp.ne.s32.totalorder %s48, %s49
      %p58 = scmp.eq.s32.totalorder %s17, 0
      %p59 = por %p57, %p58
      %p60 = scmp.ne.s32.totalorder %s48, %s49
      %p61 = scmp.eq.s32.totalorder %s18, 1
      %p62 = por %p60, %p61
      %p64 = scmp.ne.s32.totalorder %s49, %s63
      %p65 = scmp.eq.s32.totalorder %s18, 0
      %p66 = por %p64, %p65
      %s68 = sadd.s32 %s67, 1
      %p71 = scmp.eq.s32.totalorder %s12, 1
      %p72 = scmp.ne.s32.totalorder %s67, %s69
      %p73 = scmp.eq.s32.totalorder %s12, 0
      %p74 = por %p72, %p73
      %p75 = scmp.ne.s32.totalorder %s67, %s69
      %p76 = scmp.eq.s32.totalorder %s17, 1
      %p77 = por %p75, %p76
      %p78 = scmp.ne.s32.totalorder %s69, %s70
      %p79 = scmp.eq.s32.totalorder %s17, 0
      %p80 = por %p78, %p79
      %p81 = scmp.ne.s32.totalorder %s69, %s70
      %p82 = scmp.eq.s32.totalorder %s18, 1
      %p83 = por %p81, %p82
      %p85 = scmp.ne.s32.totalorder %s70, %s84
      %p86 = scmp.eq.s32.totalorder %s18, 0
      %p87 = por %p85, %p86
      %s88 = ssub.s32 %s12, %s19
      %p89 = scmp.eq.s32.totalorder %s88, 0
      %s91 = sadd.s32 %s90, 1
      %s92 = scalar_select %p89, %s90, %s91
      %p95 = pneg %p89
      %p96 = scmp.eq.s32.totalorder %s12, 1
      %p97 = por %p95, %p96
      %p98 = scmp.ne.s32.totalorder %s90, %s93
      %p99 = scmp.eq.s32.totalorder %s12, 0
      %p100 = por %p98, %p99
      %p101 = scmp.ne.s32.totalorder %s90, %s93
      %p102 = scmp.eq.s32.totalorder %s17, 1
      %p103 = por %p101, %p102
      %p104 = scmp.ne.s32.totalorder %s93, %s94
      %p105 = scmp.eq.s32.totalorder %s17, 0
      %p106 = por %p104, %p105
      %p107 = scmp.ne.s32.totalorder %s93, %s94
      %p108 = scmp.eq.s32.totalorder %s18, 1
      %p109 = por %p107, %p108
      %p111 = scmp.ne.s32.totalorder %s94, %s110
      %p112 = scmp.eq.s32.totalorder %s18, 0
      %p113 = por %p111, %p112
      %p114 = scmp.le.s32.totalorder 1, %s12
      %p115 = scmp.lt.s32.totalorder %s12, 3
      %p116 = pnand %p114, %p115
      %p117 = pneg %p116
      // Predicated region
      $region9: #{tpu_custom_call.1} parent=5 // pred_check
        _
      $region10: #{tpu_custom_call.1} parent=5 // pred_check_branch
        %119 = sbr.rel (%p116) target = $region12
      $region11: #{tpu_custom_call.1} parent=5 // pred_region
        %s120 = ssub.s32 %s12, 1
        // Predicated region
        $region13: #{tpu_custom_call.1} parent=11 // pred_check
          %p121 = pneg %p59
        $region14: #{tpu_custom_call.1} parent=11 // pred_check_branch
          %123 = sbr.rel (%p121) target = $region16
        $region15: #{tpu_custom_call.1} parent=11 // pred_region
          _
        $region16: #{tpu_custom_call.1} parent=11 // pred_fallthru
          _
        // Predicated region
        $region17: #{tpu_custom_call.1} parent=11 // pred_check
          %p124 = pneg %p80
        $region18: #{tpu_custom_call.1} parent=11 // pred_check_branch
          %126 = sbr.rel (%p124) target = $region20
        $region19: #{tpu_custom_call.1} parent=11 // pred_region
          _
        $region20: #{tpu_custom_call.1} parent=11 // pred_fallthru
          _
      $region12: #{tpu_custom_call.1} parent=5 // pred_fallthru
        _
      %p127 = scmp.lt.s32.totalorder %s12, 2
      // Predicated region
      $region21: #{tpu_custom_call.1} parent=5 // pred_check
        %p128 = pneg %p127
      $region22: #{tpu_custom_call.1} parent=5 // pred_check_branch
        %130 = sbr.rel (%p128) target = $region24
      $region23: #{tpu_custom_call.1} parent=5 // pred_region
        // Predicated region
        $region25: #{tpu_custom_call.1} parent=23 // pred_check
          %p131 = pneg %p32
        $region26: #{tpu_custom_call.1} parent=23 // pred_check_branch
          %133 = sbr.rel (%p131) target = $region28
        $region27: #{tpu_custom_call.1} parent=23 // pred_region
          %p134 = scmp.lt.s32.totalorder %s12, 1
          %s135 = scalar_select %p134, %s12, 1
          %s136 = smul.addr %s135, 4
          %s137 = scalar_lea.vmem %s0, %s136
        $region28: #{tpu_custom_call.1} parent=23 // pred_fallthru
          _
      $region24: #{tpu_custom_call.1} parent=5 // pred_fallthru
        _
      %p138 = scmp.le.s32.totalorder 1, %s12
      %p139 = scmp.lt.s32.totalorder %s12, 3
      %p140 = pnand %p138, %p139
      %p141 = pneg %p140
      // Predicated region
      $region29: #{tpu_custom_call.1} parent=5 // pred_check
        _
      $region30: #{tpu_custom_call.1} parent=5 // pred_check_branch
        %143 = sbr.rel (%p140) target = $region32
      $region31: #{tpu_custom_call.1} parent=5 // pred_region
        %s144 = ssub.s32 %s12, 1
        %p145 = scmp.lt.s32.totalorder %s17, 1
        %s146 = scalar_select %p145, %s17, 1
        %s147 = smul.addr %s146, 4
        %s148 = scalar_lea.vmem %s0, %s147
        %p149 = pneg %p38
        %p150 = pneg %p35
        %p151 = pneg %p59
        %p152 = pneg %p56
        %p153 = pneg %p80
        %p154 = pneg %p77
        %p155 = pneg %p106
        %p156 = pneg %p103
        %s157 = sand.u32 %s93, 1
        %s158 = scalar_lea.sflag [#allocation3], %s157
        %s159 = sand.u32 %s93, 1
        %s160 = smul.addr %s159, 4
        %s161 = scalar_lea.vmem [#allocation2], %s160
        %p162 = scmp.lt.s32.totalorder %s17, 1
        %s163 = scalar_select %p162, %s17, 1
        %s164 = smul.addr %s163, 4
        %s165 = scalar_lea.vmem %s0, %s164
        %v166 = vld [vmem:[%s165] sm:$0xf]
        %vm167 = vcmask 125952
        %v168 = vsel %vm167, %v166, 0.0
        %169 = vadd.xlane.f32.xlu0 %v168
        %v170 = vpop.xlane.xlu0 %169
        %v171 = vmul.f32 %v166, %v166
        %v172 = vsel %vm167, %v171, 0.0
        %173 = vadd.xlane.f32.xlu0 %v172
        %v174 = vpop.xlane.xlu0 %173
        %vm175 = vcmask 1043456
        %v176 = vsel %vm175, %v170, 0.0
        %v177 = vrot.slane %v176, 4
        %v178 = vadd.f32 %v176, %v177
        %v179 = vrot.slane %v178, 2
        %v180 = vadd.f32 %v178, %v179
        %v181 = vrot.slane %v180, 1
        %v182 = vadd.f32 %v180, %v181
        %v183 = vsel %vm175, %v174, 0.0
        %v184 = vrot.slane %v183, 4
        %v185 = vadd.f32 %v183, %v184
        %v186 = vrot.slane %v185, 2
        %v187 = vadd.f32 %v185, %v186
        %v188 = vrot.slane %v187, 1
        %v189 = vadd.f32 %v187, %v188
        %v190 = vmul.f32 %v182, 0.015625
        %v191 = vmul.f32 %v189, 0.015625
        %v192 = vmul.f32 %v190, %v190
        %v193 = vsub.f32 %v191, %v192
        %v194 = vmax.f32 %v193, 0.0
        %v195 = vadd.f32 %v194, 1e-08
        %v196 = vrsqrt.pop %v195
        %v197 = vmul.f32 %v196, %v195
        %v198 = vmul.f32 %v197, %v196
        %v199 = vmul.f32 0.5, %v198
        %v200 = vsub.f32 1.5, %v199
        %v201 = vmul.f32 %v196, %v200
        %vm202 = vweird.f32 %v195
        %vm203 = vweird.f32 %v196
        %vm204 = vmor %vm202, %vm203
        %v205 = vsel %vm204, %v196, %v201
        %v206 = vld [vmem:[%s1] sm:$0xf]
        %v207 = vld [vmem:[%s2] sm:$0xf]
        %v208 = vmul.f32 %v206, %v205
        %v209 = vmul.f32 %v190, %v208
        %v210 = vsub.f32 %v207, %v209
        %212 = vset.pattern.permute.xlu0 0
        %213 = vperm.xlu0 %212, %v208
        %v214 = vpop.permute.xlu0 %213
        %v216 = vmul.f32 %v166, %v214
        %218 = vset.pattern.permute.xlu0 0
        %219 = vperm.xlu0 %218, %v210
        %v220 = vpop.permute.xlu0 %219
        %v222 = vadd.f32 %v216, %v220
        %223 = vst.msk [vmem:[%s161] sm:$0xf] %vm167, %v222
        %s224 = sand.u32 %s93, 1
        %s225 = scalar_lea.sflag [#allocation3], %s224
        %s226 = sand.u32 %s93, 1
        %s227 = smul.addr %s226, 4
        %s228 = scalar_lea.vmem [#allocation2], %s227
        // Predicated region
        $region33: #{tpu_custom_call.1} parent=31 // pred_check
          %p229 = pneg %p103
        $region34: #{tpu_custom_call.1} parent=31 // pred_check_branch
          %231 = sbr.rel (%p229) target = $region36
        $region35: #{tpu_custom_call.1} parent=31 // pred_region
          %233 = vsyncadd %s225, 0
          %s234 = smul.addr %s17, 4
          %s235 = scalar_lea.hbm %s3, %s234
          %s237 = sshll.u32 %s228, 4
          %s238 = int_to_ptr.vmem [resolvable:$true] %s237
          %s239 = sshll.u32 %s235, 4
          %s240 = int_to_ptr.hbm [resolvable:$true] %s239
          %242 = dma.vmem_to_hbm [thread:$0]  %s238, 64, %s240, %s225
        $region36: #{tpu_custom_call.1} parent=31 // pred_fallthru
          _
      $region32: #{tpu_custom_call.1} parent=5 // pred_fallthru
        _
      %p243 = scmp.le.s32.totalorder 2, %s12
      // Predicated region
      $region37: #{tpu_custom_call.1} parent=5 // pred_check
        %p244 = pneg %p243
      $region38: #{tpu_custom_call.1} parent=5 // pred_check_branch
        %246 = sbr.rel (%p244) target = $region40
      $region39: #{tpu_custom_call.1} parent=5 // pred_region
        %s247 = ssub.s32 %s12, 2
        // Predicated region
        $region41: #{tpu_custom_call.1} parent=39 // pred_check
          %p248 = pneg %p109
        $region42: #{tpu_custom_call.1} parent=39 // pred_check_branch
          %250 = sbr.rel (%p248) target = $region44
        $region43: #{tpu_custom_call.1} parent=39 // pred_region
          %s251 = sand.u32 %s94, 1
          %s252 = scalar_lea.sflag [#allocation3], %s251
          %s253 = sand.u32 %s94, 1
          %s254 = smul.addr %s253, 4
          %s255 = scalar_lea.vmem [#allocation2], %s254
          %257 = dma.done %s252, 64
        $region44: #{tpu_custom_call.1} parent=39 // pred_fallthru
          _
      $region40: #{tpu_custom_call.1} parent=5 // pred_fallthru
        _
    $region6: #{tpu_custom_call.1} parent=1 // loop_footer
      %s16 = sadd.s32 1, %s12
    $region7: #{tpu_custom_call.1} parent=1 // loop_footer_branch
      %11 = sbr.rel target = $region3
    $region8: #{tpu_custom_call.1} parent=1 // loop_exit
      _
    %258 = vsyncpa [#allocation3], 1
    %s259 = scalar_lea.sflag [#allocation3], 1
    %260 = vsyncpa %s259, 1

</llo_original>
